<compile_context>
chip_gen: v6e
topology: v6e:2x2x1
jax: 0.10.0
libtpu: 0.0.40
codegen_flags: <defaults>
</compile_context>

<pallas_src>
import functools

import numpy as np
import jax
import jax.numpy as jnp
from jax import lax
from jax.experimental import pallas as pl
from jax.experimental.pallas import tpu as pltpu


def _loss_kernel(out_ref, tgt_ref, w_ref, b_ref, loss_ref, *,
                 l2_lambda, inv_n_elems, num_squarings, renorm_every):
    # ---- MSE ('mean') and bias sum-of-squares: independent of the spectral
    # chain; they pack into otherwise-idle VALU/vld slots under the serial
    # MXU chain and are summed only at the final store. ----
    diff = out_ref[...].astype(jnp.float32) - tgt_ref[...].astype(jnp.float32)
    mse = jnp.sum(diff * diff) * inv_n_elems

    b = b_ref[...].astype(jnp.float32)
    bias_sq = jnp.sum(b * b)

    # ---- weight (2-D param): linalg.norm(W, 2)**2 == lambda_max(W^T W) ----
    w = w_ref[...].astype(jnp.float32)
    # G = W^T W, contract over rows (axis 0 of both) -> (K, K), symmetric PSD.
    g = lax.dot_general(w, w, dimension_numbers=(((0,), (0,)), ((), ())),
                        preferred_element_type=jnp.float32)
    k = g.shape[0]
    row = lax.broadcasted_iota(jnp.int32, (k, k), 0)
    col = lax.broadcasted_iota(jnp.int32, (k, k), 1)
    diag_mask = (row == col).astype(jnp.float32)

    # Log-depth "power iteration": H ~ G^(2^p) via repeated squaring on the
    # MXU.  Renormalize only every `renorm_every` squarings (f32 headroom is
    # ample: after a renorm, lambda_max <= 16, so three raw squarings stay
    # <= ~4.3e9).  H stays PSD, so jnp.max(h) (diagonal, >= 0) is the abs-max,
    # and the approximate-reciprocal scale cancels exactly in the trace ratio.
    h = g
    for i in range(num_squarings):  # short fixed trip count -> static unroll
        if i % renorm_every == 0:
            scale = pl.reciprocal(jnp.max(h, keepdims=True) + 1e-30,
                                  approx=True)            # EUP, off the VALU
            h = h * scale
        h = jnp.dot(h, h, preferred_element_type=jnp.float32)

    # lambda_max(G) ~= trace(G @ H) / trace(H); G, H symmetric so
    # trace(G @ H) = sum(G * H).  No start vector, no per-step rsqrt chain.
    num = jnp.sum(g * h)
    den = jnp.sum(h * diag_mask)
    spec_sq = num / (den + 1e-30)      # single precise divide, off any chain

    loss_ref[0, 0] = mse + l2_lambda * (spec_sq + bias_sq)


def l2_regularized_mse_loss(outputs, targets, weight, bias, l2_lambda,
                            num_squarings=8, renorm_every=3):
    n_elems = int(np.prod(outputs.shape))
    # Lane-dense (., 128) layout for the MSE operands: a contiguous row-major
    # reshape in the wrapper is free and fills every vreg (32-lane rows would
    # waste 3/4 of each vld / VPU slot).
    if n_elems % 128 == 0:
        out2d = outputs.reshape(-1, 128)
        tgt2d = targets.reshape(-1, 128)
    else:
        out2d = outputs.reshape(outputs.shape[0], -1)
        tgt2d = targets.reshape(targets.shape[0], -1)
    bias2d = bias.reshape(1, -1)

    kernel = functools.partial(
        _loss_kernel,
        l2_lambda=float(l2_lambda),
        inv_n_elems=1.0 / float(n_elems),
        num_squarings=int(num_squarings),
        renorm_every=int(renorm_every),
    )
    out = pl.pallas_call(
        kernel,
        out_shape=jax.ShapeDtypeStruct((1, 1), jnp.float32),
        in_specs=[pl.BlockSpec(memory_space=pltpu.MemorySpace.VMEM)] * 4,
        out_specs=pl.BlockSpec(memory_space=pltpu.MemorySpace.SMEM),
    )(out2d, tgt2d, weight, bias2d)
    return out[0, 0]


if __name__ == "__main__":
    l2_lambda = 0.01
    B, IN, OUT = 8, 16, 32

    key = jax.random.PRNGKey(0)
    k1, k2, k3, k4 = jax.random.split(key, 4)
    outputs = jax.random.normal(k1, (B, OUT), dtype=jnp.float32)
    targets = jax.random.normal(k2, (B, OUT), dtype=jnp.float32)
    weight = jax.random.normal(k3, (OUT, IN), dtype=jnp.float32) * 0.1
    bias = jax.random.normal(k4, (OUT,), dtype=jnp.float32) * 0.1

    loss = jax.block_until_ready(
        l2_regularized_mse_loss(outputs, targets, weight, bias, l2_lambda))

    # Pure-numpy reference of the exact PyTorch semantics.
    o = np.asarray(outputs, dtype=np.float64)
    t = np.asarray(targets, dtype=np.float64)
    w = np.asarray(weight, dtype=np.float64)
    b = np.asarray(bias, dtype=np.float64)
    mse_ref = np.mean((o - t) ** 2)
    l2_ref = np.linalg.norm(w, 2) ** 2 + np.linalg.norm(b, 2) ** 2
    ref = mse_ref + l2_lambda * l2_ref

    assert np.abs(float(loss) - ref) / (abs(ref) + 1e-12) < 1e-3, (float(loss), ref)
    print("KERNEL_OK")
</pallas_src>

<mosaic_0001>
module attributes {stable_mosaic.version = 11 : i64} {
  func.func @_loss_kernel(%arg0: memref<2x128xf32, #tpu.memory_space<vmem>>, %arg1: memref<2x128xf32, #tpu.memory_space<vmem>>, %arg2: memref<32x16xf32, #tpu.memory_space<vmem>>, %arg3: memref<1x32xf32, #tpu.memory_space<vmem>>, %arg4: memref<1x1xf32, #tpu.memory_space<smem>>) attributes {dimension_semantics = [], scalar_prefetch = 0 : i64, scratch_operands = 0 : i64, tpu.core_type = #tpu.core_type<tc>} {
    %c0 = arith.constant 0 : index
    %c0_0 = arith.constant 0 : index
    %0 = vector.load %arg0[%c0, %c0_0] : memref<2x128xf32, #tpu.memory_space<vmem>>, vector<2x128xf32>
    %c0_1 = arith.constant 0 : index
    %c0_2 = arith.constant 0 : index
    %1 = vector.load %arg1[%c0_1, %c0_2] : memref<2x128xf32, #tpu.memory_space<vmem>>, vector<2x128xf32>
    %2 = arith.subf %0, %1 : vector<2x128xf32>
    %3 = arith.mulf %2, %2 : vector<2x128xf32>
    %4 = vector.shape_cast %3 : vector<2x128xf32> to vector<1x2x128xf32>
    %cst = arith.constant dense<0.000000e+00> : vector<1xf32>
    %5 = vector.multi_reduction <add>, %4, %cst [1, 2] : vector<1x2x128xf32> to vector<1xf32>
    %6 = vector.shape_cast %5 : vector<1xf32> to vector<1x1x1xf32>
    %7 = vector.extract %6[0, 0, 0] : f32 from vector<1x1x1xf32>
    %cst_3 = arith.constant 3.906250e-03 : f32
    %8 = arith.mulf %7, %cst_3 : f32
    %c0_4 = arith.constant 0 : index
    %c0_5 = arith.constant 0 : index
    %9 = vector.load %arg3[%c0_4, %c0_5] : memref<1x32xf32, #tpu.memory_space<vmem>>, vector<1x32xf32>
    %10 = arith.mulf %9, %9 : vector<1x32xf32>
    %11 = vector.shape_cast %10 : vector<1x32xf32> to vector<1x1x32xf32>
    %cst_6 = arith.constant dense<0.000000e+00> : vector<1xf32>
    %12 = vector.multi_reduction <add>, %11, %cst_6 [1, 2] : vector<1x1x32xf32> to vector<1xf32>
    %13 = vector.shape_cast %12 : vector<1xf32> to vector<1x1x1xf32>
    %14 = vector.extract %13[0, 0, 0] : f32 from vector<1x1x1xf32>
    %c0_7 = arith.constant 0 : index
    %c0_8 = arith.constant 0 : index
    %15 = vector.load %arg2[%c0_7, %c0_8] : memref<32x16xf32, #tpu.memory_space<vmem>>, vector<32x16xf32>
    %cst_9 = arith.constant dense<0.000000e+00> : vector<16x16xf32>
    %16 = tpu.matmul %15, %15, %cst_9 {dimension_numbers = #tpu.dot_dimension_numbers<[0], [0], [1], [1], [0, 1, 1, 1], [], []>} : vector<32x16xf32>, vector<32x16xf32>, vector<16x16xf32> -> vector<16x16xf32>
    %17 = tpu.iota {dimensions = array<i32: 0>} : vector<16x16xi32>
    %18 = tpu.iota {dimensions = array<i32: 1>} : vector<16x16xi32>
    %19 = arith.cmpi eq, %17, %18 : vector<16x16xi32>
    %20 = arith.extui %19 : vector<16x16xi1> to vector<16x16xi32>
    %21 = arith.sitofp %20 : vector<16x16xi32> to vector<16x16xf32>
    %22 = vector.shape_cast %16 : vector<16x16xf32> to vector<1x16x16xf32>
    %cst_10 = arith.constant dense<0xFF800000> : vector<1xf32>
    %23 = vector.multi_reduction <maximumf>, %22, %cst_10 [1, 2] : vector<1x16x16xf32> to vector<1xf32>
    %24 = vector.shape_cast %23 : vector<1xf32> to vector<1x1x1xf32>
    %25 = vector.extract %24[0, 0, 0] : f32 from vector<1x1x1xf32>
    %26 = vector.broadcast %25 : f32 to vector<1x1xf32>
    %cst_11 = arith.constant 1.000000e-30 : f32
    %27 = vector.broadcast %cst_11 : f32 to vector<1x1xf32>
    %28 = arith.addf %26, %27 : vector<1x1xf32>
    %29 = tpu.reciprocal %28 {approx = true} : vector<1x1xf32> -> vector<1x1xf32>
    %30 = vector.broadcast %29 : vector<1x1xf32> to vector<16x16xf32>
    %31 = arith.mulf %16, %30 : vector<16x16xf32>
    %cst_12 = arith.constant dense<0.000000e+00> : vector<16x16xf32>
    %32 = tpu.matmul %31, %31, %cst_12 {dimension_numbers = #tpu.dot_dimension_numbers<[1], [0], [0], [1], [0, 0, 1, 1], [], []>} : vector<16x16xf32>, vector<16x16xf32>, vector<16x16xf32> -> vector<16x16xf32>
    %cst_13 = arith.constant dense<0.000000e+00> : vector<16x16xf32>
    %33 = tpu.matmul %32, %32, %cst_13 {dimension_numbers = #tpu.dot_dimension_numbers<[1], [0], [0], [1], [0, 0, 1, 1], [], []>} : vector<16x16xf32>, vector<16x16xf32>, vector<16x16xf32> -> vector<16x16xf32>
    %cst_14 = arith.constant dense<0.000000e+00> : vector<16x16xf32>
    %34 = tpu.matmul %33, %33, %cst_14 {dimension_numbers = #tpu.dot_dimension_numbers<[1], [0], [0], [1], [0, 0, 1, 1], [], []>} : vector<16x16xf32>, vector<16x16xf32>, vector<16x16xf32> -> vector<16x16xf32>
    %35 = vector.shape_cast %34 : vector<16x16xf32> to vector<1x16x16xf32>
    %cst_15 = arith.constant dense<0xFF800000> : vector<1xf32>
    %36 = vector.multi_reduction <maximumf>, %35, %cst_15 [1, 2] : vector<1x16x16xf32> to vector<1xf32>
    %37 = vector.shape_cast %36 : vector<1xf32> to vector<1x1x1xf32>
    %38 = vector.extract %37[0, 0, 0] : f32 from vector<1x1x1xf32>
    %39 = vector.broadcast %38 : f32 to vector<1x1xf32>
    %cst_16 = arith.constant 1.000000e-30 : f32
    %40 = vector.broadcast %cst_16 : f32 to vector<1x1xf32>
    %41 = arith.addf %39, %40 : vector<1x1xf32>
    %42 = tpu.reciprocal %41 {approx = true} : vector<1x1xf32> -> vector<1x1xf32>
    %43 = vector.broadcast %42 : vector<1x1xf32> to vector<16x16xf32>
    %44 = arith.mulf %34, %43 : vector<16x16xf32>
    %cst_17 = arith.constant dense<0.000000e+00> : vector<16x16xf32>
    %45 = tpu.matmul %44, %44, %cst_17 {dimension_numbers = #tpu.dot_dimension_numbers<[1], [0], [0], [1], [0, 0, 1, 1], [], []>} : vector<16x16xf32>, vector<16x16xf32>, vector<16x16xf32> -> vector<16x16xf32>
    %cst_18 = arith.constant dense<0.000000e+00> : vector<16x16xf32>
    %46 = tpu.matmul %45, %45, %cst_18 {dimension_numbers = #tpu.dot_dimension_numbers<[1], [0], [0], [1], [0, 0, 1, 1], [], []>} : vector<16x16xf32>, vector<16x16xf32>, vector<16x16xf32> -> vector<16x16xf32>
    %cst_19 = arith.constant dense<0.000000e+00> : vector<16x16xf32>
    %47 = tpu.matmul %46, %46, %cst_19 {dimension_numbers = #tpu.dot_dimension_numbers<[1], [0], [0], [1], [0, 0, 1, 1], [], []>} : vector<16x16xf32>, vector<16x16xf32>, vector<16x16xf32> -> vector<16x16xf32>
    %48 = vector.shape_cast %47 : vector<16x16xf32> to vector<1x16x16xf32>
    %cst_20 = arith.constant dense<0xFF800000> : vector<1xf32>
    %49 = vector.multi_reduction <maximumf>, %48, %cst_20 [1, 2] : vector<1x16x16xf32> to vector<1xf32>
    %50 = vector.shape_cast %49 : vector<1xf32> to vector<1x1x1xf32>
    %51 = vector.extract %50[0, 0, 0] : f32 from vector<1x1x1xf32>
    %52 = vector.broadcast %51 : f32 to vector<1x1xf32>
    %cst_21 = arith.constant 1.000000e-30 : f32
    %53 = vector.broadcast %cst_21 : f32 to vector<1x1xf32>
    %54 = arith.addf %52, %53 : vector<1x1xf32>
    %55 = tpu.reciprocal %54 {approx = true} : vector<1x1xf32> -> vector<1x1xf32>
    %56 = vector.broadcast %55 : vector<1x1xf32> to vector<16x16xf32>
    %57 = arith.mulf %47, %56 : vector<16x16xf32>
    %cst_22 = arith.constant dense<0.000000e+00> : vector<16x16xf32>
    %58 = tpu.matmul %57, %57, %cst_22 {dimension_numbers = #tpu.dot_dimension_numbers<[1], [0], [0], [1], [0, 0, 1, 1], [], []>} : vector<16x16xf32>, vector<16x16xf32>, vector<16x16xf32> -> vector<16x16xf32>
    %cst_23 = arith.constant dense<0.000000e+00> : vector<16x16xf32>
    %59 = tpu.matmul %58, %58, %cst_23 {dimension_numbers = #tpu.dot_dimension_numbers<[1], [0], [0], [1], [0, 0, 1, 1], [], []>} : vector<16x16xf32>, vector<16x16xf32>, vector<16x16xf32> -> vector<16x16xf32>
    %60 = arith.mulf %16, %59 : vector<16x16xf32>
    %61 = vector.shape_cast %60 : vector<16x16xf32> to vector<1x16x16xf32>
    %cst_24 = arith.constant dense<0.000000e+00> : vector<1xf32>
    %62 = vector.multi_reduction <add>, %61, %cst_24 [1, 2] : vector<1x16x16xf32> to vector<1xf32>
    %63 = vector.shape_cast %62 : vector<1xf32> to vector<1x1x1xf32>
    %64 = vector.extract %63[0, 0, 0] : f32 from vector<1x1x1xf32>
    %65 = arith.mulf %59, %21 : vector<16x16xf32>
    %66 = vector.shape_cast %65 : vector<16x16xf32> to vector<1x16x16xf32>
    %cst_25 = arith.constant dense<0.000000e+00> : vector<1xf32>
    %67 = vector.multi_reduction <add>, %66, %cst_25 [1, 2] : vector<1x16x16xf32> to vector<1xf32>
    %68 = vector.shape_cast %67 : vector<1xf32> to vector<1x1x1xf32>
    %69 = vector.extract %68[0, 0, 0] : f32 from vector<1x1x1xf32>
    %cst_26 = arith.constant 1.000000e-30 : f32
    %70 = arith.addf %69, %cst_26 : f32
    %71 = arith.divf %64, %70 : f32
    %72 = arith.addf %71, %14 : f32
    %cst_27 = arith.constant 0.00999999977 : f32
    %73 = arith.mulf %cst_27, %72 : f32
    %74 = arith.addf %8, %73 : f32
    %c0_28 = arith.constant 0 : index
    %c0_29 = arith.constant 0 : index
    %75 = memref.load %arg4[%c0_28, %c0_29] : memref<1x1xf32, #tpu.memory_space<smem>>
    memref.store %74, %arg4[%c0_28, %c0_29] : memref<1x1xf32, #tpu.memory_space<smem>>
    return
  }
}

</mosaic_0001>

<llo_original>
// kernel: tpu_custom_call.1
$region0: #{tpu_custom_call.1}
  #allocation0 [shape = 'u32[]', space=smem, size = 0x4, offset = 0x4, fixed_abs, tag = 'smem constant byte address 0x4 - core index']
  #allocation1 [shape = 'u32[144,128]{1,0:T(1,128)}', space=vmem, size = 0x12000, scoped, tag = 'internal scratch']
  %s0 = inlined_call_operand.vmem [shape: f32[2,128], index: 0, kind: input, shape index: {}]
  %s1 = inlined_call_operand.vmem [shape: f32[2,128], index: 1, kind: input, shape index: {}]
  %s2 = inlined_call_operand.vmem [shape: f32[32,16], index: 2, kind: input, shape index: {}]
  %s3 = inlined_call_operand.vmem [shape: f32[1,32], index: 3, kind: input, shape index: {}]
  %s4 = inlined_call_operand.hbm [shape: f32[1,1], index: 4, kind: output, shape index: {}]
  %s5 = sld [smem:[#allocation0]]
  $region26: #{tpu_custom_call.1} parent=0
    _
  %s7 = ssub.s32 1, %s5
  %s8 = scalar_select 0, %s7, %s5
  $region1: #{tpu_custom_call.1} parent=0
    #allocation2 [shape = 'u8[512]{0}', space=smem, size = 0x200, scoped, tag = 'output window, operand 0, single buffered']
    #allocation3 [shape = 's32[1]{0}', space=sflag, size = 0x4, scoped, tag = 'scoped memory for tpu_custom_call.1']
    %9 = vsyncpa [#allocation3], 0
    // Predicated region
    $region2: #{tpu_custom_call.1} parent=1 // pred_check
      _
    $region3: #{tpu_custom_call.1} parent=1 // pred_check_branch
      %11 = sbr.rel (0) target = $region5
    $region4: #{tpu_custom_call.1} parent=1 // pred_region
      _
    $region5: #{tpu_custom_call.1} parent=1 // pred_fallthru
      _
    // Predicated region
    $region6: #{tpu_custom_call.1} parent=1 // pred_check
      _
    $region7: #{tpu_custom_call.1} parent=1 // pred_check_branch
      %13 = sbr.rel (0) target = $region9
    $region8: #{tpu_custom_call.1} parent=1 // pred_region
      _
    $region9: #{tpu_custom_call.1} parent=1 // pred_fallthru
      _
    // Predicated region
    $region10: #{tpu_custom_call.1} parent=1 // pred_check
      _
    $region11: #{tpu_custom_call.1} parent=1 // pred_check_branch
      %15 = sbr.rel (0) target = $region13
    $region12: #{tpu_custom_call.1} parent=1 // pred_region
      _
    $region13: #{tpu_custom_call.1} parent=1 // pred_fallthru
      _
    // Predicated region
    $region14: #{tpu_custom_call.1} parent=1 // pred_check
      _
    $region15: #{tpu_custom_call.1} parent=1 // pred_check_branch
      %17 = sbr.rel (0) target = $region17
    $region16: #{tpu_custom_call.1} parent=1 // pred_region
      _
    $region17: #{tpu_custom_call.1} parent=1 // pred_fallthru
      _
    %v18 = vld [vmem:[%s0] sm:$0x3]
    %v19 = vld [vmem:[%s1] sm:$0x3]
    %v20 = vsub.f32 %v18, %v19
    %v21 = vmul.f32 %v20, %v20
    %vm22 = vcmask 1041408
    %v23 = vsel %vm22, %v21, 0.0
    %24 = vadd.xlane.f32.xlu0 %v23
    %v25 = vpop.xlane.xlu0 %24
    %v26 = vrot.slane %v25, 4
    %v27 = vadd.f32 %v25, %v26
    %v28 = vrot.slane %v27, 2
    %v29 = vadd.f32 %v27, %v28
    %v30 = vrot.slane %v29, 1
    %v31 = vadd.f32 %v29, %v30
    %s32 = vtos %v31
    %s33 = smul.f32 %s32, 0.00390625
    %v34 = vld [vmem:[%s3] sm:$0x1]
    %v35 = vmul.f32 %v34, %v34
    %vm36 = vcmask 253952
    %v37 = vsel %vm36, %v35, 0.0
    %38 = vadd.xlane.f32.xlu0 %v37
    %v39 = vpop.xlane.xlu0 %38
    %v40 = vrot.slane %v39, 4
    %v41 = vadd.f32 %v39, %v40
    %v42 = vrot.slane %v41, 2
    %v43 = vadd.f32 %v41, %v42
    %v44 = vrot.slane %v43, 1
    %v45 = vadd.f32 %v43, %v44
    %s46 = vtos %v45
    %v47 = vld [vmem:[%s2] sm:$0xff]
    %v48 = vld [vmem:[%s2 + $0x8] sm:$0xff]
    %v49 = vld [vmem:[%s2 + $0x10] sm:$0xff]
    %v50 = vld [vmem:[%s2 + $0x18] sm:$0xff]
    %51 = vxpose.xlu0.b32.start [1/16] %v47, 128
    %52 = vxpose.xlu0.b32.cont [2/16] %v48, 128
    %53 = vxpose.xlu0.b32.cont [3/16] %v49, 128
    %54 = vxpose.xlu0.b32.cont [4/16] %v50, 128
    %55 = vxpose.xlu0.b32.cont [5/16] 0.0, 128
    %56 = vxpose.xlu0.b32.cont [6/16] 0.0, 128
    %57 = vxpose.xlu0.b32.cont [7/16] 0.0, 128
    %58 = vxpose.xlu0.b32.cont [8/16] 0.0, 128
    %59 = vxpose.xlu0.b32.cont [9/16] 0.0, 128
    %60 = vxpose.xlu0.b32.cont [10/16] 0.0, 128
    %61 = vxpose.xlu0.b32.cont [11/16] 0.0, 128
    %62 = vxpose.xlu0.b32.cont [12/16] 0.0, 128
    %63 = vxpose.xlu0.b32.cont [13/16] 0.0, 128
    %64 = vxpose.xlu0.b32.cont [14/16] 0.0, 128
    %65 = vxpose.xlu0.b32.cont [15/16] 0.0, 128
    %66 = vxpose.xlu0.b32.end [16/16] 0.0, 128
    %v67 = vpop.trf.xlu0
    %v68 = vpop.trf.xlu0
    %v69 = vpop.trf.xlu0
    %v70 = vpop.trf.xlu0
    %v71 = vpop.trf.xlu0
    %v72 = vpop.trf.xlu0
    %v73 = vpop.trf.xlu0
    %v74 = vpop.trf.xlu0
    %v75 = vpop.trf.xlu0
    %v76 = vpop.trf.xlu0
    %v77 = vpop.trf.xlu0
    %v78 = vpop.trf.xlu0
    %v79 = vpop.trf.xlu0
    %v80 = vpop.trf.xlu0
    %v81 = vpop.trf.xlu0
    %v82 = vpop.trf.xlu0
    %vm83 = vcmask 261120
    %v85 = vsel %vm83, %v67, 0
    %v88 = vsel %vm83, %v68, 0
    %90 = vmatprep.subr.mxu0 0.0
    %91 = vmatpush1.msra.mxu0 0.0
    %92 = vmatprep.subr.mxu0 0.0
    %93 = vmatpush1.msra.mxu0 0.0
    %94 = vmatprep.subr.mxu0 0.0
    %95 = vmatpush1.msra.mxu0 0.0
    %96 = vmatprep.subr.mxu0 0.0
    %97 = vmatpush1.msra.mxu0 0.0
    %98 = vmatprep.subr.mxu0 0.0
    %99 = vmatpush1.msra.mxu0 0.0
    %100 = vmatprep.subr.mxu0 0.0
    %101 = vmatpush1.msra.mxu0 0.0
    %102 = vmatprep.subr.mxu0 0.0
    %103 = vmatpush1.msra.mxu0 0.0
    %104 = vmatprep.subr.mxu0 0.0
    %105 = vmatpush1.msra.mxu0 0.0
    %106 = vmatprep.subr.mxu0 0.0
    %107 = vmatpush1.msra.mxu0 0.0
    %108 = vmatprep.subr.mxu0 0.0
    %109 = vmatpush1.msra.mxu0 0.0
    %110 = vmatprep.subr.mxu0 0.0
    %111 = vmatpush1.msra.mxu0 0.0
    %112 = vmatprep.subr.mxu0 0.0
    %113 = vmatpush1.msra.mxu0 0.0
    %114 = vmatprep.subr.mxu0 0.0
    %115 = vmatpush1.msra.mxu0 %v50
    %116 = vmatprep.subr.mxu0 0.0
    %117 = vmatpush1.msra.mxu0 %v49
    %118 = vmatprep.subr.mxu0 0.0
    %119 = vmatpush1.msra.mxu0 %v48
    %120 = vmatprep.subr.mxu0 0.0
    %121 = vmatpush1.msra.mxu0 %v47
    %122 = vmatprep.subr.mxu0 0.0
    %123 = vmatpush2.msra.mxu0 0.0
    %124 = vmatprep.subr.mxu0 0.0
    %125 = vmatpush2.msra.mxu0 0.0
    %126 = vmatprep.subr.mxu0 0.0
    %127 = vmatpush2.msra.mxu0 0.0
    %128 = vmatprep.subr.mxu0 0.0
    %129 = vmatpush2.msra.mxu0 0.0
    %130 = vmatprep.subr.mxu0 0.0
    %131 = vmatpush2.msra.mxu0 0.0
    %132 = vmatprep.subr.mxu0 0.0
    %133 = vmatpush2.msra.mxu0 0.0
    %134 = vmatprep.subr.mxu0 0.0
    %135 = vmatpush2.msra.mxu0 0.0
    %136 = vmatprep.subr.mxu0 0.0
    %137 = vmatpush2.msra.mxu0 0.0
    %138 = vmatprep.subr.mxu0 0.0
    %139 = vmatpush2.msra.mxu0 0.0
    %140 = vmatprep.subr.mxu0 0.0
    %141 = vmatpush2.msra.mxu0 0.0
    %142 = vmatprep.subr.mxu0 0.0
    %143 = vmatpush2.msra.mxu0 0.0
    %144 = vmatprep.subr.mxu0 0.0
    %145 = vmatpush2.msra.mxu0 0.0
    %146 = vmatprep.subr.mxu0 0.0
    %147 = vmatpush2.msra.mxu0 0.0
    %148 = vmatprep.subr.mxu0 0.0
    %149 = vmatpush2.msra.mxu0 0.0
    %150 = vmatprep.subr.mxu0 0.0
    %151 = vmatpush2.msra.mxu0 0.0
    %152 = vmatprep.subr.mxu0 0.0
    %153 = vmatpush2.msra.mxu0 0.0
    %154 = vmatprep.mubr.f32.mxu0 0.0
    %155 = vmatmul.mubr.f32.gmra.mxu0 %v85
    %v156 = vpop.f32.mrf.mxu0
    %v157 = vadd.f32 0.0, %v156
    %v158 = vpop.f32.mrf.mxu0
    %159 = vmatprep.mubr.f32.mxu0 0.0
    %160 = vmatmul.mubr.f32.gmra.mxu0 %v88
    %v161 = vpop.f32.mrf.mxu0
    %v162 = vadd.f32 0.0, %v161
    %v163 = vpop.f32.mrf.mxu0
    %164 = vdwg.mxu0
    %v165 = vlaneseq
    %v166 = vshrl.u32 %v165, 7
    %v167 = vadd.s32 %v166, 8
    %v168 = vlaneseq
    %v169 = vand.u32 %v168, 127
    %vm170 = vcmp.eq.s32.totalorder %v166, %v169
    %vm171 = vcmp.eq.s32.totalorder %v167, %v169
    %v172 = vsel %vm170, 1, 0
    %v173 = vsel %vm171, 1, 0
    %v174 = vcvt.s32.f32 %v172
    %v175 = vcvt.s32.f32 %v173
    %vm176 = vcmask 130048
    %v177 = vsel %vm176, %v157, -inf
    %v178 = vsel %vm176, %v162, -inf
    %v179 = vmax.f32 %v177, %v178
    %180 = vmax.xlane.f32.xlu0 %v179
    %v181 = vpop.xlane.xlu0 %180
    %v182 = vrot.slane %v181, 4
    %v183 = vmax.f32 %v181, %v182
    %v184 = vrot.slane %v183, 2
    %v185 = vmax.f32 %v183, %v184
    %v186 = vrot.slane %v185, 1
    %v187 = vmax.f32 %v185, %v186
    %s188 = vtos %v187
    %v189 = vstv %s188
    %v190 = vadd.f32 %v189, 1e-30
    %v191 = vrcp.pop %v190
    %v192 = vmul.f32 %v157, %v191
    %v193 = vmul.f32 %v162, %v191
    %v195 = vsel %vm176, %v192, 0
    %v198 = vsel %vm176, %v193, 0
    %200 = vmatprep.subr.mxu0 0.0
    %201 = vmatpush1.msra.mxu0 0.0
    %202 = vmatprep.subr.mxu0 0.0
    %203 = vmatpush1.msra.mxu0 0.0
    %204 = vmatprep.subr.mxu0 0.0
    %205 = vmatpush1.msra.mxu0 0.0
    %206 = vmatprep.subr.mxu0 0.0
    %207 = vmatpush1.msra.mxu0 0.0
    %208 = vmatprep.subr.mxu0 0.0
    %209 = vmatpush1.msra.mxu0 0.0
    %210 = vmatprep.subr.mxu0 0.0
    %211 = vmatpush1.msra.mxu0 0.0
    %212 = vmatprep.subr.mxu0 0.0
    %213 = vmatpush1.msra.mxu0 0.0
    %214 = vmatprep.subr.mxu0 0.0
    %215 = vmatpush1.msra.mxu0 0.0
    %216 = vmatprep.subr.mxu0 0.0
    %217 = vmatpush1.msra.mxu0 0.0
    %218 = vmatprep.subr.mxu0 0.0
    %219 = vmatpush1.msra.mxu0 0.0
    %220 = vmatprep.subr.mxu0 0.0
    %221 = vmatpush1.msra.mxu0 0.0
    %222 = vmatprep.subr.mxu0 0.0
    %223 = vmatpush1.msra.mxu0 0.0
    %224 = vmatprep.subr.mxu0 0.0
    %225 = vmatpush1.msra.mxu0 0.0
    %226 = vmatprep.subr.mxu0 0.0
    %227 = vmatpush1.msra.mxu0 0.0
    %228 = vmatprep.subr.mxu0 0.0
    %229 = vmatpush1.msra.mxu0 %v193
    %230 = vmatprep.subr.mxu0 0.0
    %231 = vmatpush1.msra.mxu0 %v192
    %232 = vmatprep.subr.mxu0 0.0
    %233 = vmatpush2.msra.mxu0 0.0
    %234 = vmatprep.subr.mxu0 0.0
    %235 = vmatpush2.msra.mxu0 0.0
    %236 = vmatprep.subr.mxu0 0.0
    %237 = vmatpush2.msra.mxu0 0.0
    %238 = vmatprep.subr.mxu0 0.0
    %239 = vmatpush2.msra.mxu0 0.0
    %240 = vmatprep.subr.mxu0 0.0
    %241 = vmatpush2.msra.mxu0 0.0
    %242 = vmatprep.subr.mxu0 0.0
    %243 = vmatpush2.msra.mxu0 0.0
    %244 = vmatprep.subr.mxu0 0.0
    %245 = vmatpush2.msra.mxu0 0.0
    %246 = vmatprep.subr.mxu0 0.0
    %247 = vmatpush2.msra.mxu0 0.0
    %248 = vmatprep.subr.mxu0 0.0
    %249 = vmatpush2.msra.mxu0 0.0
    %250 = vmatprep.subr.mxu0 0.0
    %251 = vmatpush2.msra.mxu0 0.0
    %252 = vmatprep.subr.mxu0 0.0
    %253 = vmatpush2.msra.mxu0 0.0
    %254 = vmatprep.subr.mxu0 0.0
    %255 = vmatpush2.msra.mxu0 0.0
    %256 = vmatprep.subr.mxu0 0.0
    %257 = vmatpush2.msra.mxu0 0.0
    %258 = vmatprep.subr.mxu0 0.0
    %259 = vmatpush2.msra.mxu0 0.0
    %260 = vmatprep.subr.mxu0 0.0
    %261 = vmatpush2.msra.mxu0 0.0
    %262 = vmatprep.subr.mxu0 0.0
    %263 = vmatpush2.msra.mxu0 0.0
    %264 = vmatprep.mubr.f32.mxu0 0.0
    %265 = vmatmul.mubr.f32.gmra.mxu0 %v195
    %v266 = vpop.f32.mrf.mxu0
    %v267 = vadd.f32 0.0, %v266
    %v268 = vpop.f32.mrf.mxu0
    %269 = vmatprep.mubr.f32.mxu0 0.0
    %270 = vmatmul.mubr.f32.gmra.mxu0 %v198
    %v271 = vpop.f32.mrf.mxu0
    %v272 = vadd.f32 0.0, %v271
    %v273 = vpop.f32.mrf.mxu0
    %274 = vdwg.mxu0
    %v276 = vsel %vm176, %v267, 0
    %v279 = vsel %vm176, %v272, 0
    %281 = vmatprep.subr.mxu0 0.0
    %282 = vmatpush1.msra.mxu0 0.0
    %283 = vmatprep.subr.mxu0 0.0
    %284 = vmatpush1.msra.mxu0 0.0
    %285 = vmatprep.subr.mxu0 0.0
    %286 = vmatpush1.msra.mxu0 0.0
    %287 = vmatprep.subr.mxu0 0.0
    %288 = vmatpush1.msra.mxu0 0.0
    %289 = vmatprep.subr.mxu0 0.0
    %290 = vmatpush1.msra.mxu0 0.0
    %291 = vmatprep.subr.mxu0 0.0
    %292 = vmatpush1.msra.mxu0 0.0
    %293 = vmatprep.subr.mxu0 0.0
    %294 = vmatpush1.msra.mxu0 0.0
    %295 = vmatprep.subr.mxu0 0.0
    %296 = vmatpush1.msra.mxu0 0.0
    %297 = vmatprep.subr.mxu0 0.0
    %298 = vmatpush1.msra.mxu0 0.0
    %299 = vmatprep.subr.mxu0 0.0
    %300 = vmatpush1.msra.mxu0 0.0
    %301 = vmatprep.subr.mxu0 0.0
    %302 = vmatpush1.msra.mxu0 0.0
    %303 = vmatprep.subr.mxu0 0.0
    %304 = vmatpush1.msra.mxu0 0.0
    %305 = vmatprep.subr.mxu0 0.0
    %306 = vmatpush1.msra.mxu0 0.0
    %307 = vmatprep.subr.mxu0 0.0
    %308 = vmatpush1.msra.mxu0 0.0
    %309 = vmatprep.subr.mxu0 0.0
    %310 = vmatpush1.msra.mxu0 %v272
    %311 = vmatprep.subr.mxu0 0.0
    %312 = vmatpush1.msra.mxu0 %v267
    %313 = vmatprep.subr.mxu0 0.0
    %314 = vmatpush2.msra.mxu0 0.0
    %315 = vmatprep.subr.mxu0 0.0
    %316 = vmatpush2.msra.mxu0 0.0
    %317 = vmatprep.subr.mxu0 0.0
    %318 = vmatpush2.msra.mxu0 0.0
    %319 = vmatprep.subr.mxu0 0.0
    %320 = vmatpush2.msra.mxu0 0.0
    %321 = vmatprep.subr.mxu0 0.0
    %322 = vmatpush2.msra.mxu0 0.0
    %323 = vmatprep.subr.mxu0 0.0
    %324 = vmatpush2.msra.mxu0 0.0
    %325 = vmatprep.subr.mxu0 0.0
    %326 = vmatpush2.msra.mxu0 0.0
    %327 = vmatprep.subr.mxu0 0.0
    %328 = vmatpush2.msra.mxu0 0.0
    %329 = vmatprep.subr.mxu0 0.0
    %330 = vmatpush2.msra.mxu0 0.0
    %331 = vmatprep.subr.mxu0 0.0
    %332 = vmatpush2.msra.mxu0 0.0
    %333 = vmatprep.subr.mxu0 0.0
    %334 = vmatpush2.msra.mxu0 0.0
    %335 = vmatprep.subr.mxu0 0.0
    %336 = vmatpush2.msra.mxu0 0.0
    %337 = vmatprep.subr.mxu0 0.0
    %338 = vmatpush2.msra.mxu0 0.0
    %339 = vmatprep.subr.mxu0 0.0
    %340 = vmatpush2.msra.mxu0 0.0
    %341 = vmatprep.subr.mxu0 0.0
    %342 = vmatpush2.msra.mxu0 0.0
    %343 = vmatprep.subr.mxu0 0.0
    %344 = vmatpush2.msra.mxu0 0.0
    %345 = vmatprep.mubr.f32.mxu0 0.0
    %346 = vmatmul.mubr.f32.gmra.mxu0 %v276
    %v347 = vpop.f32.mrf.mxu0
    %v348 = vadd.f32 0.0, %v347
    %v349 = vpop.f32.mrf.mxu0
    %350 = vmatprep.mubr.f32.mxu0 0.0
    %351 = vmatmul.mubr.f32.gmra.mxu0 %v279
    %v352 = vpop.f32.mrf.mxu0
    %v353 = vadd.f32 0.0, %v352
    %v354 = vpop.f32.mrf.mxu0
    %355 = vdwg.mxu0
    %v357 = vsel %vm176, %v348, 0
    %v360 = vsel %vm176, %v353, 0
    %362 = vmatprep.subr.mxu0 0.0
    %363 = vmatpush1.msra.mxu0 0.0
    %364 = vmatprep.subr.mxu0 0.0
    %365 = vmatpush1.msra.mxu0 0.0
    %366 = vmatprep.subr.mxu0 0.0
    %367 = vmatpush1.msra.mxu0 0.0
    %368 = vmatprep.subr.mxu0 0.0
    %369 = vmatpush1.msra.mxu0 0.0
    %370 = vmatprep.subr.mxu0 0.0
    %371 = vmatpush1.msra.mxu0 0.0
    %372 = vmatprep.subr.mxu0 0.0
    %373 = vmatpush1.msra.mxu0 0.0
    %374 = vmatprep.subr.mxu0 0.0
    %375 = vmatpush1.msra.mxu0 0.0
    %376 = vmatprep.subr.mxu0 0.0
    %377 = vmatpush1.msra.mxu0 0.0
    %378 = vmatprep.subr.mxu0 0.0
    %379 = vmatpush1.msra.mxu0 0.0
    %380 = vmatprep.subr.mxu0 0.0
    %381 = vmatpush1.msra.mxu0 0.0
    %382 = vmatprep.subr.mxu0 0.0
    %383 = vmatpush1.msra.mxu0 0.0
    %384 = vmatprep.subr.mxu0 0.0
    %385 = vmatpush1.msra.mxu0 0.0
    %386 = vmatprep.subr.mxu0 0.0
    %387 = vmatpush1.msra.mxu0 0.0
    %388 = vmatprep.subr.mxu0 0.0
    %389 = vmatpush1.msra.mxu0 0.0
    %390 = vmatprep.subr.mxu0 0.0
    %391 = vmatpush1.msra.mxu0 %v353
    %392 = vmatprep.subr.mxu0 0.0
    %393 = vmatpush1.msra.mxu0 %v348
    %394 = vmatprep.subr.mxu0 0.0
    %395 = vmatpush2.msra.mxu0 0.0
    %396 = vmatprep.subr.mxu0 0.0
    %397 = vmatpush2.msra.mxu0 0.0
    %398 = vmatprep.subr.mxu0 0.0
    %399 = vmatpush2.msra.mxu0 0.0
    %400 = vmatprep.subr.mxu0 0.0
    %401 = vmatpush2.msra.mxu0 0.0
    %402 = vmatprep.subr.mxu0 0.0
    %403 = vmatpush2.msra.mxu0 0.0
    %404 = vmatprep.subr.mxu0 0.0
    %405 = vmatpush2.msra.mxu0 0.0
    %406 = vmatprep.subr.mxu0 0.0
    %407 = vmatpush2.msra.mxu0 0.0
    %408 = vmatprep.subr.mxu0 0.0
    %409 = vmatpush2.msra.mxu0 0.0
    %410 = vmatprep.subr.mxu0 0.0
    %411 = vmatpush2.msra.mxu0 0.0
    %412 = vmatprep.subr.mxu0 0.0
    %413 = vmatpush2.msra.mxu0 0.0
    %414 = vmatprep.subr.mxu0 0.0
    %415 = vmatpush2.msra.mxu0 0.0
    %416 = vmatprep.subr.mxu0 0.0
    %417 = vmatpush2.msra.mxu0 0.0
    %418 = vmatprep.subr.mxu0 0.0
    %419 = vmatpush2.msra.mxu0 0.0
    %420 = vmatprep.subr.mxu0 0.0
    %421 = vmatpush2.msra.mxu0 0.0
    %422 = vmatprep.subr.mxu0 0.0
    %423 = vmatpush2.msra.mxu0 0.0
    %424 = vmatprep.subr.mxu0 0.0
    %425 = vmatpush2.msra.mxu0 0.0
    %426 = vmatprep.mubr.f32.mxu0 0.0
    %427 = vmatmul.mubr.f32.gmra.mxu0 %v357
    %v428 = vpop.f32.mrf.mxu0
    %v429 = vadd.f32 0.0, %v428
    %v430 = vpop.f32.mrf.mxu0
    %431 = vmatprep.mubr.f32.mxu0 0.0
    %432 = vmatmul.mubr.f32.gmra.mxu0 %v360
    %v433 = vpop.f32.mrf.mxu0
    %v434 = vadd.f32 0.0, %v433
    %v435 = vpop.f32.mrf.mxu0
    %436 = vdwg.mxu0
    %v437 = vsel %vm176, %v429, -inf
    %v438 = vsel %vm176, %v434, -inf
    %v439 = vmax.f32 %v437, %v438
    %440 = vmax.xlane.f32.xlu0 %v439
    %v441 = vpop.xlane.xlu0 %440
    %v442 = vrot.slane %v441, 4
    %v443 = vmax.f32 %v441, %v442
    %v444 = vrot.slane %v443, 2
    %v445 = vmax.f32 %v443, %v444
    %v446 = vrot.slane %v445, 1
    %v447 = vmax.f32 %v445, %v446
    %s448 = vtos %v447
    %v449 = vstv %s448
    %v450 = vadd.f32 %v449, 1e-30
    %v451 = vrcp.pop %v450
    %v452 = vmul.f32 %v429, %v451
    %v453 = vmul.f32 %v434, %v451
    %v455 = vsel %vm176, %v452, 0
    %v458 = vsel %vm176, %v453, 0
    %460 = vmatprep.subr.mxu0 0.0
    %461 = vmatpush1.msra.mxu0 0.0
    %462 = vmatprep.subr.mxu0 0.0
    %463 = vmatpush1.msra.mxu0 0.0
    %464 = vmatprep.subr.mxu0 0.0
    %465 = vmatpush1.msra.mxu0 0.0
    %466 = vmatprep.subr.mxu0 0.0
    %467 = vmatpush1.msra.mxu0 0.0
    %468 = vmatprep.subr.mxu0 0.0
    %469 = vmatpush1.msra.mxu0 0.0
    %470 = vmatprep.subr.mxu0 0.0
    %471 = vmatpush1.msra.mxu0 0.0
    %472 = vmatprep.subr.mxu0 0.0
    %473 = vmatpush1.msra.mxu0 0.0
    %474 = vmatprep.subr.mxu0 0.0
    %475 = vmatpush1.msra.mxu0 0.0
    %476 = vmatprep.subr.mxu0 0.0
    %477 = vmatpush1.msra.mxu0 0.0
    %478 = vmatprep.subr.mxu0 0.0
    %479 = vmatpush1.msra.mxu0 0.0
    %480 = vmatprep.subr.mxu0 0.0
    %481 = vmatpush1.msra.mxu0 0.0
    %482 = vmatprep.subr.mxu0 0.0
    %483 = vmatpush1.msra.mxu0 0.0
    %484 = vmatprep.subr.mxu0 0.0
    %485 = vmatpush1.msra.mxu0 0.0
    %486 = vmatprep.subr.mxu0 0.0
    %487 = vmatpush1.msra.mxu0 0.0
    %488 = vmatprep.subr.mxu0 0.0
    %489 = vmatpush1.msra.mxu0 %v453
    %490 = vmatprep.subr.mxu0 0.0
    %491 = vmatpush1.msra.mxu0 %v452
    %492 = vmatprep.subr.mxu0 0.0
    %493 = vmatpush2.msra.mxu0 0.0
    %494 = vmatprep.subr.mxu0 0.0
    %495 = vmatpush2.msra.mxu0 0.0
    %496 = vmatprep.subr.mxu0 0.0
    %497 = vmatpush2.msra.mxu0 0.0
    %498 = vmatprep.subr.mxu0 0.0
    %499 = vmatpush2.msra.mxu0 0.0
    %500 = vmatprep.subr.mxu0 0.0
    %501 = vmatpush2.msra.mxu0 0.0
    %502 = vmatprep.subr.mxu0 0.0
    %503 = vmatpush2.msra.mxu0 0.0
    %504 = vmatprep.subr.mxu0 0.0
    %505 = vmatpush2.msra.mxu0 0.0
    %506 = vmatprep.subr.mxu0 0.0
    %507 = vmatpush2.msra.mxu0 0.0
    %508 = vmatprep.subr.mxu0 0.0
    %509 = vmatpush2.msra.mxu0 0.0
    %510 = vmatprep.subr.mxu0 0.0
    %511 = vmatpush2.msra.mxu0 0.0
    %512 = vmatprep.subr.mxu0 0.0
    %513 = vmatpush2.msra.mxu0 0.0
    %514 = vmatprep.subr.mxu0 0.0
    %515 = vmatpush2.msra.mxu0 0.0
    %516 = vmatprep.subr.mxu0 0.0
    %517 = vmatpush2.msra.mxu0 0.0
    %518 = vmatprep.subr.mxu0 0.0
    %519 = vmatpush2.msra.mxu0 0.0
    %520 = vmatprep.subr.mxu0 0.0
    %521 = vmatpush2.msra.mxu0 0.0
    %522 = vmatprep.subr.mxu0 0.0
    %523 = vmatpush2.msra.mxu0 0.0
    %524 = vmatprep.mubr.f32.mxu0 0.0
    %525 = vmatmul.mubr.f32.gmra.mxu0 %v455
    %v526 = vpop.f32.mrf.mxu0
    %v527 = vadd.f32 0.0, %v526
    %v528 = vpop.f32.mrf.mxu0
    %529 = vmatprep.mubr.f32.mxu0 0.0
    %530 = vmatmul.mubr.f32.gmra.mxu0 %v458
    %v531 = vpop.f32.mrf.mxu0
    %v532 = vadd.f32 0.0, %v531
    %v533 = vpop.f32.mrf.mxu0
    %534 = vdwg.mxu0
    %v536 = vsel %vm176, %v527, 0
    %v539 = vsel %vm176, %v532, 0
    %541 = vmatprep.subr.mxu0 0.0
    %542 = vmatpush1.msra.mxu0 0.0
    %543 = vmatprep.subr.mxu0 0.0
    %544 = vmatpush1.msra.mxu0 0.0
    %545 = vmatprep.subr.mxu0 0.0
    %546 = vmatpush1.msra.mxu0 0.0
    %547 = vmatprep.subr.mxu0 0.0
    %548 = vmatpush1.msra.mxu0 0.0
    %549 = vmatprep.subr.mxu0 0.0
    %550 = vmatpush1.msra.mxu0 0.0
    %551 = vmatprep.subr.mxu0 0.0
    %552 = vmatpush1.msra.mxu0 0.0
    %553 = vmatprep.subr.mxu0 0.0
    %554 = vmatpush1.msra.mxu0 0.0
    %555 = vmatprep.subr.mxu0 0.0
    %556 = vmatpush1.msra.mxu0 0.0
    %557 = vmatprep.subr.mxu0 0.0
    %558 = vmatpush1.msra.mxu0 0.0
    %559 = vmatprep.subr.mxu0 0.0
    %560 = vmatpush1.msra.mxu0 0.0
    %561 = vmatprep.subr.mxu0 0.0
    %562 = vmatpush1.msra.mxu0 0.0
    %563 = vmatprep.subr.mxu0 0.0
    %564 = vmatpush1.msra.mxu0 0.0
    %565 = vmatprep.subr.mxu0 0.0
    %566 = vmatpush1.msra.mxu0 0.0
    %567 = vmatprep.subr.mxu0 0.0
    %568 = vmatpush1.msra.mxu0 0.0
    %569 = vmatprep.subr.mxu0 0.0
    %570 = vmatpush1.msra.mxu0 %v532
    %571 = vmatprep.subr.mxu0 0.0
    %572 = vmatpush1.msra.mxu0 %v527
    %573 = vmatprep.subr.mxu0 0.0
    %574 = vmatpush2.msra.mxu0 0.0
    %575 = vmatprep.subr.mxu0 0.0
    %576 = vmatpush2.msra.mxu0 0.0
    %577 = vmatprep.subr.mxu0 0.0
    %578 = vmatpush2.msra.mxu0 0.0
    %579 = vmatprep.subr.mxu0 0.0
    %580 = vmatpush2.msra.mxu0 0.0
    %581 = vmatprep.subr.mxu0 0.0
    %582 = vmatpush2.msra.mxu0 0.0
    %583 = vmatprep.subr.mxu0 0.0
    %584 = vmatpush2.msra.mxu0 0.0
    %585 = vmatprep.subr.mxu0 0.0
    %586 = vmatpush2.msra.mxu0 0.0
    %587 = vmatprep.subr.mxu0 0.0
    %588 = vmatpush2.msra.mxu0 0.0
    %589 = vmatprep.subr.mxu0 0.0
    %590 = vmatpush2.msra.mxu0 0.0
    %591 = vmatprep.subr.mxu0 0.0
    %592 = vmatpush2.msra.mxu0 0.0
    %593 = vmatprep.subr.mxu0 0.0
    %594 = vmatpush2.msra.mxu0 0.0
    %595 = vmatprep.subr.mxu0 0.0
    %596 = vmatpush2.msra.mxu0 0.0
    %597 = vmatprep.subr.mxu0 0.0
    %598 = vmatpush2.msra.mxu0 0.0
    %599 = vmatprep.subr.mxu0 0.0
    %600 = vmatpush2.msra.mxu0 0.0
    %601 = vmatprep.subr.mxu0 0.0
    %602 = vmatpush2.msra.mxu0 0.0
    %603 = vmatprep.subr.mxu0 0.0
    %604 = vmatpush2.msra.mxu0 0.0
    %605 = vmatprep.mubr.f32.mxu0 0.0
    %606 = vmatmul.mubr.f32.gmra.mxu0 %v536
    %v607 = vpop.f32.mrf.mxu0
    %v608 = vadd.f32 0.0, %v607
    %v609 = vpop.f32.mrf.mxu0
    %610 = vmatprep.mubr.f32.mxu0 0.0
    %611 = vmatmul.mubr.f32.gmra.mxu0 %v539
    %v612 = vpop.f32.mrf.mxu0
    %v613 = vadd.f32 0.0, %v612
    %v614 = vpop.f32.mrf.mxu0
    %615 = vdwg.mxu0
    %v617 = vsel %vm176, %v608, 0
    %v620 = vsel %vm176, %v613, 0
    %622 = vmatprep.subr.mxu0 0.0
    %623 = vmatpush1.msra.mxu0 0.0
    %624 = vmatprep.subr.mxu0 0.0
    %625 = vmatpush1.msra.mxu0 0.0
    %626 = vmatprep.subr.mxu0 0.0
    %627 = vmatpush1.msra.mxu0 0.0
    %628 = vmatprep.subr.mxu0 0.0
    %629 = vmatpush1.msra.mxu0 0.0
    %630 = vmatprep.subr.mxu0 0.0
    %631 = vmatpush1.msra.mxu0 0.0
    %632 = vmatprep.subr.mxu0 0.0
    %633 = vmatpush1.msra.mxu0 0.0
    %634 = vmatprep.subr.mxu0 0.0
    %635 = vmatpush1.msra.mxu0 0.0
    %636 = vmatprep.subr.mxu0 0.0
    %637 = vmatpush1.msra.mxu0 0.0
    %638 = vmatprep.subr.mxu0 0.0
    %639 = vmatpush1.msra.mxu0 0.0
    %640 = vmatprep.subr.mxu0 0.0
    %641 = vmatpush1.msra.mxu0 0.0
    %642 = vmatprep.subr.mxu0 0.0
    %643 = vmatpush1.msra.mxu0 0.0
    %644 = vmatprep.subr.mxu0 0.0
    %645 = vmatpush1.msra.mxu0 0.0
    %646 = vmatprep.subr.mxu0 0.0
    %647 = vmatpush1.msra.mxu0 0.0
    %648 = vmatprep.subr.mxu0 0.0
    %649 = vmatpush1.msra.mxu0 0.0
    %650 = vmatprep.subr.mxu0 0.0
    %651 = vmatpush1.msra.mxu0 %v613
    %652 = vmatprep.subr.mxu0 0.0
    %653 = vmatpush1.msra.mxu0 %v608
    %654 = vmatprep.subr.mxu0 0.0
    %655 = vmatpush2.msra.mxu0 0.0
    %656 = vmatprep.subr.mxu0 0.0
    %657 = vmatpush2.msra.mxu0 0.0
    %658 = vmatprep.subr.mxu0 0.0
    %659 = vmatpush2.msra.mxu0 0.0
    %660 = vmatprep.subr.mxu0 0.0
    %661 = vmatpush2.msra.mxu0 0.0
    %662 = vmatprep.subr.mxu0 0.0
    %663 = vmatpush2.msra.mxu0 0.0
    %664 = vmatprep.subr.mxu0 0.0
    %665 = vmatpush2.msra.mxu0 0.0
    %666 = vmatprep.subr.mxu0 0.0
    %667 = vmatpush2.msra.mxu0 0.0
    %668 = vmatprep.subr.mxu0 0.0
    %669 = vmatpush2.msra.mxu0 0.0
    %670 = vmatprep.subr.mxu0 0.0
    %671 = vmatpush2.msra.mxu0 0.0
    %672 = vmatprep.subr.mxu0 0.0
    %673 = vmatpush2.msra.mxu0 0.0
    %674 = vmatprep.subr.mxu0 0.0
    %675 = vmatpush2.msra.mxu0 0.0
    %676 = vmatprep.subr.mxu0 0.0
    %677 = vmatpush2.msra.mxu0 0.0
    %678 = vmatprep.subr.mxu0 0.0
    %679 = vmatpush2.msra.mxu0 0.0
    %680 = vmatprep.subr.mxu0 0.0
    %681 = vmatpush2.msra.mxu0 0.0
    %682 = vmatprep.subr.mxu0 0.0
    %683 = vmatpush2.msra.mxu0 0.0
    %684 = vmatprep.subr.mxu0 0.0
    %685 = vmatpush2.msra.mxu0 0.0
    %686 = vmatprep.mubr.f32.mxu0 0.0
    %687 = vmatmul.mubr.f32.gmra.mxu0 %v617
    %v688 = vpop.f32.mrf.mxu0
    %v689 = vadd.f32 0.0, %v688
    %v690 = vpop.f32.mrf.mxu0
    %691 = vmatprep.mubr.f32.mxu0 0.0
    %692 = vmatmul.mubr.f32.gmra.mxu0 %v620
    %v693 = vpop.f32.mrf.mxu0
    %v694 = vadd.f32 0.0, %v693
    %v695 = vpop.f32.mrf.mxu0
    %696 = vdwg.mxu0
    %v697 = vsel %vm176, %v689, -inf
    %v698 = vsel %vm176, %v694, -inf
    %v699 = vmax.f32 %v697, %v698
    %700 = vmax.xlane.f32.xlu0 %v699
    %v701 = vpop.xlane.xlu0 %700
    %v702 = vrot.slane %v701, 4
    %v703 = vmax.f32 %v701, %v702
    %v704 = vrot.slane %v703, 2
    %v705 = vmax.f32 %v703, %v704
    %v706 = vrot.slane %v705, 1
    %v707 = vmax.f32 %v705, %v706
    %s708 = vtos %v707
    %v709 = vstv %s708
    %v710 = vadd.f32 %v709, 1e-30
    %v711 = vrcp.pop %v710
    %v712 = vmul.f32 %v689, %v711
    %v713 = vmul.f32 %v694, %v711
    %v715 = vsel %vm176, %v712, 0
    %v718 = vsel %vm176, %v713, 0
    %720 = vmatprep.subr.mxu0 0.0
    %721 = vmatpush1.msra.mxu0 0.0
    %722 = vmatprep.subr.mxu0 0.0
    %723 = vmatpush1.msra.mxu0 0.0
    %724 = vmatprep.subr.mxu0 0.0
    %725 = vmatpush1.msra.mxu0 0.0
    %726 = vmatprep.subr.mxu0 0.0
    %727 = vmatpush1.msra.mxu0 0.0
    %728 = vmatprep.subr.mxu0 0.0
    %729 = vmatpush1.msra.mxu0 0.0
    %730 = vmatprep.subr.mxu0 0.0
    %731 = vmatpush1.msra.mxu0 0.0
    %732 = vmatprep.subr.mxu0 0.0
    %733 = vmatpush1.msra.mxu0 0.0
    %734 = vmatprep.subr.mxu0 0.0
    %735 = vmatpush1.msra.mxu0 0.0
    %736 = vmatprep.subr.mxu0 0.0
    %737 = vmatpush1.msra.mxu0 0.0
    %738 = vmatprep.subr.mxu0 0.0
    %739 = vmatpush1.msra.mxu0 0.0
    %740 = vmatprep.subr.mxu0 0.0
    %741 = vmatpush1.msra.mxu0 0.0
    %742 = vmatprep.subr.mxu0 0.0
    %743 = vmatpush1.msra.mxu0 0.0
    %744 = vmatprep.subr.mxu0 0.0
    %745 = vmatpush1.msra.mxu0 0.0
    %746 = vmatprep.subr.mxu0 0.0
    %747 = vmatpush1.msra.mxu0 0.0
    %748 = vmatprep.subr.mxu0 0.0
    %749 = vmatpush1.msra.mxu0 %v713
    %750 = vmatprep.subr.mxu0 0.0
    %751 = vmatpush1.msra.mxu0 %v712
    %752 = vmatprep.subr.mxu0 0.0
    %753 = vmatpush2.msra.mxu0 0.0
    %754 = vmatprep.subr.mxu0 0.0
    %755 = vmatpush2.msra.mxu0 0.0
    %756 = vmatprep.subr.mxu0 0.0
    %757 = vmatpush2.msra.mxu0 0.0
    %758 = vmatprep.subr.mxu0 0.0
    %759 = vmatpush2.msra.mxu0 0.0
    %760 = vmatprep.subr.mxu0 0.0
    %761 = vmatpush2.msra.mxu0 0.0
    %762 = vmatprep.subr.mxu0 0.0
    %763 = vmatpush2.msra.mxu0 0.0
    %764 = vmatprep.subr.mxu0 0.0
    %765 = vmatpush2.msra.mxu0 0.0
    %766 = vmatprep.subr.mxu0 0.0
    %767 = vmatpush2.msra.mxu0 0.0
    %768 = vmatprep.subr.mxu0 0.0
    %769 = vmatpush2.msra.mxu0 0.0
    %770 = vmatprep.subr.mxu0 0.0
    %771 = vmatpush2.msra.mxu0 0.0
    %772 = vmatprep.subr.mxu0 0.0
    %773 = vmatpush2.msra.mxu0 0.0
    %774 = vmatprep.subr.mxu0 0.0
    %775 = vmatpush2.msra.mxu0 0.0
    %776 = vmatprep.subr.mxu0 0.0
    %777 = vmatpush2.msra.mxu0 0.0
    %778 = vmatprep.subr.mxu0 0.0
    %779 = vmatpush2.msra.mxu0 0.0
    %780 = vmatprep.subr.mxu0 0.0
    %781 = vmatpush2.msra.mxu0 0.0
    %782 = vmatprep.subr.mxu0 0.0
    %783 = vmatpush2.msra.mxu0 0.0
    %784 = vmatprep.mubr.f32.mxu0 0.0
    %785 = vmatmul.mubr.f32.gmra.mxu0 %v715
    %v786 = vpop.f32.mrf.mxu0
    %v787 = vadd.f32 0.0, %v786
    %v788 = vpop.f32.mrf.mxu0
    %789 = vmatprep.mubr.f32.mxu0 0.0
    %790 = vmatmul.mubr.f32.gmra.mxu0 %v718
    %v791 = vpop.f32.mrf.mxu0
    %v792 = vadd.f32 0.0, %v791
    %v793 = vpop.f32.mrf.mxu0
    %794 = vdwg.mxu0
    %v796 = vsel %vm176, %v787, 0
    %v799 = vsel %vm176, %v792, 0
    %801 = vmatprep.subr.mxu0 0.0
    %802 = vmatpush1.msra.mxu0 0.0
    %803 = vmatprep.subr.mxu0 0.0
    %804 = vmatpush1.msra.mxu0 0.0
    %805 = vmatprep.subr.mxu0 0.0
    %806 = vmatpush1.msra.mxu0 0.0
    %807 = vmatprep.subr.mxu0 0.0
    %808 = vmatpush1.msra.mxu0 0.0
    %809 = vmatprep.subr.mxu0 0.0
    %810 = vmatpush1.msra.mxu0 0.0
    %811 = vmatprep.subr.mxu0 0.0
    %812 = vmatpush1.msra.mxu0 0.0
    %813 = vmatprep.subr.mxu0 0.0
    %814 = vmatpush1.msra.mxu0 0.0
    %815 = vmatprep.subr.mxu0 0.0
    %816 = vmatpush1.msra.mxu0 0.0
    %817 = vmatprep.subr.mxu0 0.0
    %818 = vmatpush1.msra.mxu0 0.0
    %819 = vmatprep.subr.mxu0 0.0
    %820 = vmatpush1.msra.mxu0 0.0
    %821 = vmatprep.subr.mxu0 0.0
    %822 = vmatpush1.msra.mxu0 0.0
    %823 = vmatprep.subr.mxu0 0.0
    %824 = vmatpush1.msra.mxu0 0.0
    %825 = vmatprep.subr.mxu0 0.0
    %826 = vmatpush1.msra.mxu0 0.0
    %827 = vmatprep.subr.mxu0 0.0
    %828 = vmatpush1.msra.mxu0 0.0
    %829 = vmatprep.subr.mxu0 0.0
    %830 = vmatpush1.msra.mxu0 %v792
    %831 = vmatprep.subr.mxu0 0.0
    %832 = vmatpush1.msra.mxu0 %v787
    %833 = vmatprep.subr.mxu0 0.0
    %834 = vmatpush2.msra.mxu0 0.0
    %835 = vmatprep.subr.mxu0 0.0
    %836 = vmatpush2.msra.mxu0 0.0
    %837 = vmatprep.subr.mxu0 0.0
    %838 = vmatpush2.msra.mxu0 0.0
    %839 = vmatprep.subr.mxu0 0.0
    %840 = vmatpush2.msra.mxu0 0.0
    %841 = vmatprep.subr.mxu0 0.0
    %842 = vmatpush2.msra.mxu0 0.0
    %843 = vmatprep.subr.mxu0 0.0
    %844 = vmatpush2.msra.mxu0 0.0
    %845 = vmatprep.subr.mxu0 0.0
    %846 = vmatpush2.msra.mxu0 0.0
    %847 = vmatprep.subr.mxu0 0.0
    %848 = vmatpush2.msra.mxu0 0.0
    %849 = vmatprep.subr.mxu0 0.0
    %850 = vmatpush2.msra.mxu0 0.0
    %851 = vmatprep.subr.mxu0 0.0
    %852 = vmatpush2.msra.mxu0 0.0
    %853 = vmatprep.subr.mxu0 0.0
    %854 = vmatpush2.msra.mxu0 0.0
    %855 = vmatprep.subr.mxu0 0.0
    %856 = vmatpush2.msra.mxu0 0.0
    %857 = vmatprep.subr.mxu0 0.0
    %858 = vmatpush2.msra.mxu0 0.0
    %859 = vmatprep.subr.mxu0 0.0
    %860 = vmatpush2.msra.mxu0 0.0
    %861 = vmatprep.subr.mxu0 0.0
    %862 = vmatpush2.msra.mxu0 0.0
    %863 = vmatprep.subr.mxu0 0.0
    %864 = vmatpush2.msra.mxu0 0.0
    %865 = vmatprep.mubr.f32.mxu0 0.0
    %866 = vmatmul.mubr.f32.gmra.mxu0 %v796
    %v867 = vpop.f32.mrf.mxu0
    %v868 = vadd.f32 0.0, %v867
    %v869 = vpop.f32.mrf.mxu0
    %870 = vmatprep.mubr.f32.mxu0 0.0
    %871 = vmatmul.mubr.f32.gmra.mxu0 %v799
    %v872 = vpop.f32.mrf.mxu0
    %v873 = vadd.f32 0.0, %v872
    %v874 = vpop.f32.mrf.mxu0
    %875 = vdwg.mxu0
    %v876 = vmul.f32 %v157, %v868
    %v877 = vmul.f32 %v162, %v873
    %v878 = vsel %vm176, %v876, 0.0
    %v879 = vsel %vm176, %v877, 0.0
    %v880 = vadd.f32 %v878, %v879
    %881 = vadd.xlane.f32.xlu0 %v880
    %v882 = vpop.xlane.xlu0 %881
    %v883 = vrot.slane %v882, 4
    %v884 = vadd.f32 %v882, %v883
    %v885 = vrot.slane %v884, 2
    %v886 = vadd.f32 %v884, %v885
    %v887 = vrot.slane %v886, 1
    %v888 = vadd.f32 %v886, %v887
    %s889 = vtos %v888
    %v890 = vmul.f32 %v868, %v174
    %v891 = vmul.f32 %v873, %v175
    %v892 = vsel %vm176, %v890, 0.0
    %v893 = vsel %vm176, %v891, 0.0
    %v894 = vadd.f32 %v892, %v893
    %895 = vadd.xlane.f32.xlu0 %v894
    %v896 = vpop.xlane.xlu0 %895
    %v897 = vrot.slane %v896, 4
    %v898 = vadd.f32 %v896, %v897
    %v899 = vrot.slane %v898, 2
    %v900 = vadd.f32 %v898, %v899
    %v901 = vrot.slane %v900, 1
    %v902 = vadd.f32 %v900, %v901
    %s903 = vtos %v902
    %s904 = sadd.f32 %s903, 1e-30
    %v905 = vstv %s904
    %v906 = vrcp.pop %v905
    %s907 = vtos %v906
    %s908 = smul.f32 %s889, %s907
    %s909 = sadd.f32 %s908, %s46
    %s910 = smul.f32 %s909, 0.01
    %s911 = sadd.f32 %s33, %s910
    %s912 = scalar_lea.smem [#allocation2], 0
    %913 = sst [smem:[%s912]] %s911
    // Predicated region
    $region18: #{tpu_custom_call.1} parent=1 // pred_check
      _
    $region19: #{tpu_custom_call.1} parent=1 // pred_check_branch
      %915 = sbr.rel (0) target = $region21
    $region20: #{tpu_custom_call.1} parent=1 // pred_region
      %s917 = ssub.s32 16, 16
      %918 = vsyncadd [#allocation3], %s917
      %921 = dma.smem_to_hbm [#allocation2], 16, %s4, [#allocation3]
    $region21: #{tpu_custom_call.1} parent=1 // pred_fallthru
      _
    // Predicated region
    $region22: #{tpu_custom_call.1} parent=1 // pred_check
      _
    $region23: #{tpu_custom_call.1} parent=1 // pred_check_branch
      %923 = sbr.rel (0) target = $region25
    $region24: #{tpu_custom_call.1} parent=1 // pred_region
      %924 = dma.done [#allocation3], 16
    $region25: #{tpu_custom_call.1} parent=1 // pred_fallthru
      _
    %925 = sfence
    %926 = vsyncpa [#allocation3], 1

</llo_original>
